<compile_context>
chip_gen: v6e
topology: v6e:2x2x1
jax: 0.10.0
libtpu: 0.0.40
codegen_flags: <defaults>
</compile_context>

<pallas_src>
import functools

import jax
import jax.numpy as jnp
from jax.experimental import pallas as pl
from jax.experimental.pallas import tpu as pltpu


def _round_up(x, m):
    return (x + m - 1) // m * m


def _linear_kernel(x_ref, w_ref, b_ref, o_ref, acc_ref):
    # x_ref: (tm, tk) bf16, w_ref: (tk, tn) bf16, b_ref: (1, tn) f32,
    # o_ref: (tm, tn) f32, acc_ref: (tm, tn) f32 VMEM scratch.
    k = pl.program_id(2)

    @pl.when(k == 0)
    def _():
        acc_ref[...] = jnp.zeros_like(acc_ref)

    acc_ref[...] += jnp.dot(
        x_ref[...], w_ref[...], preferred_element_type=jnp.float32
    )

    @pl.when(k == pl.num_programs(2) - 1)
    def _():
        # bias add + cast only once, after the full K reduction.
        o_ref[...] = (acc_ref[...] + b_ref[...]).astype(o_ref.dtype)


def prepare_classifier_params(weight, bias, compute_dtype=jnp.bfloat16):
    """One-time parameter prep (do this at init, NOT per forward call).

    weight: (output_dims, input_dims)  -- PyTorch nn.Linear layout
    bias:   (output_dims,)

    Returns:
      w_prep: (K_pad, N_pad) compute_dtype, pre-transposed + zero-padded
      b_prep: (1, N_pad) f32, zero-padded
      dims:   (input_dims, output_dims) original logical dims
    """
    out_dims, in_dims = weight.shape
    # Pad K to a 128 multiple only when it will be tiled; small / odd K stays a
    # single full-K block (allowed by the (8,128) rule when block == full dim).
    k_pad = in_dims if (in_dims % 128 == 0 or in_dims <= 512) else _round_up(in_dims, 128)
    n_pad = _round_up(out_dims, 128)

    w_prep = jnp.zeros((k_pad, n_pad), compute_dtype)
    w_prep = w_prep.at[:in_dims, :out_dims].set(weight.T.astype(compute_dtype))
    b_prep = jnp.zeros((1, n_pad), jnp.float32)
    b_prep = b_prep.at[0, :out_dims].set(bias.astype(jnp.float32))
    return w_prep, b_prep, (in_dims, out_dims)


def classifier_forward(x, w_prep, b_prep, dims, compute_dtype=jnp.bfloat16):
    """x: (B, *feature_dims); w_prep/b_prep from prepare_classifier_params."""
    in_dims, out_dims = dims
    B = x.shape[0]
    x2d = x.reshape(B, -1)                      # glue: flatten, plain JAX
    assert x2d.shape[1] == in_dims, (x2d.shape, in_dims)

    k_pad, n_pad = w_prep.shape

    # ---- tile selection -----------------------------------------------------
    tm = 128 if B >= 128 else _round_up(B, 8)
    m_pad = _round_up(B, tm)
    tn = 256 if n_pad % 256 == 0 else 128
    if k_pad % 512 == 0:
        tk = 512
    elif k_pad % 256 == 0:
        tk = 256
    elif k_pad % 128 == 0:
        tk = 128
    else:
        tk = k_pad                               # single full-K block (small K)

    # ---- input prep (cast to MXU dtype, zero-pad M/K to tile multiples) -----
    x_p = x2d.astype(compute_dtype)
    if m_pad != B or k_pad != in_dims:
        x_p = jnp.pad(x_p, ((0, m_pad - B), (0, k_pad - in_dims)))

    grid = (m_pad // tm, n_pad // tn, k_pad // tk)

    # ---- VMEM budget & cost hint --------------------------------------------
    itemsize = jnp.dtype(compute_dtype).itemsize
    vmem_est = (
        2 * (tm * tk + tk * tn) * itemsize       # double-buffered bf16 inputs
        + 2 * (tm * tn + tn) * 4                 # double-buffered f32 out + bias
        + tm * tn * 4                            # f32 accumulator scratch
    )
    vmem_limit = int(min(64 * 1024 * 1024, max(2 * vmem_est, 16 * 1024 * 1024)))

    cost = pl.CostEstimate(
        flops=2 * m_pad * k_pad * n_pad,
        transcendentals=0,
        bytes_accessed=(
            m_pad * k_pad * itemsize
            + k_pad * n_pad * itemsize
            + n_pad * 4
            + m_pad * n_pad * 4
        ),
    )

    out_padded = pl.pallas_call(
        _linear_kernel,
        out_shape=jax.ShapeDtypeStruct((m_pad, n_pad), jnp.float32),
        grid=grid,
        in_specs=[
            pl.BlockSpec((tm, tk), lambda i, j, k: (i, k)),
            pl.BlockSpec((tk, tn), lambda i, j, k: (k, j)),
            pl.BlockSpec((1, tn), lambda i, j, k: (0, j)),
        ],
        out_specs=pl.BlockSpec((tm, tn), lambda i, j, k: (i, j)),
        scratch_shapes=[pltpu.VMEM((tm, tn), jnp.float32)],
        compiler_params=pltpu.CompilerParams(
            dimension_semantics=("parallel", "parallel", "arbitrary"),
            vmem_limit_bytes=vmem_limit,
        ),
        cost_estimate=cost,
    )(x_p, w_prep, b_prep)

    return out_padded[:B, :out_dims]


if __name__ == "__main__":
    key = jax.random.PRNGKey(0)
    k_x, k_w, k_b = jax.random.split(key, 3)

    # Small shapes consistent with the module: x of shape (B, C, T) -> flatten to (B, C*T)
    B, C, T = 2, 4, 16
    input_dims = C * T          # 64
    output_dims = 8

    x = jax.random.normal(k_x, (B, C, T), jnp.float32)

    # PyTorch nn.Linear default init: U(-1/sqrt(in), 1/sqrt(in))
    bound = 1.0 / (input_dims ** 0.5)
    weight = jax.random.uniform(
        k_w, (output_dims, input_dims), jnp.float32, minval=-bound, maxval=bound
    )
    bias = jax.random.uniform(
        k_b, (output_dims,), jnp.float32, minval=-bound, maxval=bound
    )

    # One-time param prep (transpose, pad, cast) -- outside the hot path.
    w_prep, b_prep, dims = prepare_classifier_params(weight, bias)

    fwd = jax.jit(functools.partial(classifier_forward, dims=dims))
    out = jax.block_until_ready(fwd(x, w_prep, b_prep))

    # Reference 1: exact same precision as the kernel (bf16 inputs, f32 accum).
    x2d = x.reshape(B, -1)
    ref_same_prec = (
        jnp.dot(
            x2d.astype(jnp.bfloat16),
            w_prep[:input_dims, :output_dims],
            preferred_element_type=jnp.float32,
        )
        + bias
    )
    # Reference 2: full-f32 PyTorch semantics (looser tolerance, bf16 rounding).
    ref_f32 = x2d @ weight.T + bias

    assert out.shape == (B, output_dims)
    assert jnp.allclose(out, ref_same_prec, atol=1e-4, rtol=1e-4)
    assert jnp.allclose(out, ref_f32, atol=5e-2, rtol=0.0)

    print("KERNEL_OK")
</pallas_src>

<mosaic_0001>
module attributes {stable_mosaic.version = 11 : i64} {
  func.func @_linear_kernel(%arg0: i32, %arg1: i32, %arg2: i32, %arg3: memref<8x64xbf16, #tpu.memory_space<vmem>>, %arg4: memref<64x128xbf16, #tpu.memory_space<vmem>>, %arg5: memref<1x128xf32, #tpu.memory_space<vmem>>, %arg6: memref<8x128xf32, #tpu.memory_space<vmem>>, %arg7: memref<8x128xf32, #tpu.memory_space<vmem>>) attributes {dimension_semantics = [#tpu.dimension_semantics<parallel>, #tpu.dimension_semantics<parallel>, #tpu.dimension_semantics<arbitrary>], iteration_bounds = array<i64: 1, 1, 1>, scalar_prefetch = 0 : i64, scratch_operands = 1 : i64, tpu.core_type = #tpu.core_type<tc>, window_params = [{transform_indices = @transform_0, window_bounds = array<i64: 8, 64>}, {transform_indices = @transform_1, window_bounds = array<i64: 64, 128>}, {transform_indices = @transform_2, window_bounds = array<i64: 1, 128>}, {transform_indices = @transform_3, window_bounds = array<i64: 8, 128>}]} {
    %c0_i32 = arith.constant 0 : i32
    %0 = arith.cmpi eq, %arg2, %c0_i32 : i32
    %1 = arith.extui %0 : i1 to i32
    %c0_i32_0 = arith.constant 0 : i32
    %2 = arith.cmpi ne, %1, %c0_i32_0 : i32
    scf.if %2 {
      %cst_10 = arith.constant 0.000000e+00 : f32
      %12 = vector.broadcast %cst_10 : f32 to vector<8x128xf32>
      %c0_11 = arith.constant 0 : index
      %c0_12 = arith.constant 0 : index
      %13 = vector.load %arg7[%c0_11, %c0_12] : memref<8x128xf32, #tpu.memory_space<vmem>>, vector<8x128xf32>
      tpu.vector_store %arg7[%c0_11, %c0_12], %12 {strides = array<i32>} : memref<8x128xf32, #tpu.memory_space<vmem>>, vector<8x128xf32>,
    } else {
    }
    %c0 = arith.constant 0 : index
    %c0_1 = arith.constant 0 : index
    %3 = vector.load %arg7[%c0, %c0_1] : memref<8x128xf32, #tpu.memory_space<vmem>>, vector<8x128xf32>
    %c0_2 = arith.constant 0 : index
    %c0_3 = arith.constant 0 : index
    %4 = vector.load %arg3[%c0_2, %c0_3] : memref<8x64xbf16, #tpu.memory_space<vmem>>, vector<8x64xbf16>
    %c0_4 = arith.constant 0 : index
    %c0_5 = arith.constant 0 : index
    %5 = vector.load %arg4[%c0_4, %c0_5] : memref<64x128xbf16, #tpu.memory_space<vmem>>, vector<64x128xbf16>
    %cst = arith.constant dense<0.000000e+00> : vector<8x128xf32>
    %6 = tpu.matmul %4, %5, %cst {dimension_numbers = #tpu.dot_dimension_numbers<[1], [0], [0], [1], [0, 0, 1, 1], [], []>} : vector<8x64xbf16>, vector<64x128xbf16>, vector<8x128xf32> -> vector<8x128xf32>
    %7 = arith.addf %3, %6 : vector<8x128xf32>
    %c0_6 = arith.constant 0 : index
    %c0_7 = arith.constant 0 : index
    %8 = vector.load %arg7[%c0_6, %c0_7] : memref<8x128xf32, #tpu.memory_space<vmem>>, vector<8x128xf32>
    tpu.vector_store %arg7[%c0_6, %c0_7], %7 {strides = array<i32>} : memref<8x128xf32, #tpu.memory_space<vmem>>, vector<8x128xf32>,
    %c0_i32_8 = arith.constant 0 : i32
    %9 = arith.cmpi eq, %arg2, %c0_i32_8 : i32
    %10 = arith.extui %9 : i1 to i32
    %c0_i32_9 = arith.constant 0 : i32
    %11 = arith.cmpi ne, %10, %c0_i32_9 : i32
    scf.if %11 {
      %c0_10 = arith.constant 0 : index
      %c0_11 = arith.constant 0 : index
      %12 = vector.load %arg7[%c0_10, %c0_11] : memref<8x128xf32, #tpu.memory_space<vmem>>, vector<8x128xf32>
      %c0_12 = arith.constant 0 : index
      %c0_13 = arith.constant 0 : index
      %13 = vector.load %arg5[%c0_12, %c0_13] : memref<1x128xf32, #tpu.memory_space<vmem>>, vector<1x128xf32>
      %14 = vector.broadcast %13 : vector<1x128xf32> to vector<8x128xf32>
      %15 = arith.addf %12, %14 : vector<8x128xf32>
      %c0_14 = arith.constant 0 : index
      %c0_15 = arith.constant 0 : index
      %16 = vector.load %arg6[%c0_14, %c0_15] : memref<8x128xf32, #tpu.memory_space<vmem>>, vector<8x128xf32>
      tpu.vector_store %arg6[%c0_14, %c0_15], %15 {strides = array<i32>} : memref<8x128xf32, #tpu.memory_space<vmem>>, vector<8x128xf32>,
    } else {
    }
    return
  }
  func.func @transform_0(%arg0: i32, %arg1: i32, %arg2: i32) -> (i32, i32) {
    %c0_i32 = arith.constant 0 : i32
    return %arg0, %arg2 : i32, i32
  }
  func.func @transform_1(%arg0: i32, %arg1: i32, %arg2: i32) -> (i32, i32) {
    %c0_i32 = arith.constant 0 : i32
    return %arg2, %arg1 : i32, i32
  }
  func.func @transform_2(%arg0: i32, %arg1: i32, %arg2: i32) -> (i32, i32) {
    %c0_i32 = arith.constant 0 : i32
    %c0_i32_0 = arith.constant 0 : i32
    return %c0_i32, %arg1 : i32, i32
  }
  func.func @transform_3(%arg0: i32, %arg1: i32, %arg2: i32) -> (i32, i32) {
    %c0_i32 = arith.constant 0 : i32
    return %arg0, %arg1 : i32, i32
  }
}

</mosaic_0001>

<llo_original>
// kernel: classifier_forward.1
$region0: #{classifier_forward.1}
  #allocation0 [shape = 'u32[]', space=smem, size = 0x4, offset = 0x4, fixed_abs, tag = 'smem constant byte address 0x4 - core index']
  #allocation1 [shape = 'u32[144,128]{1,0:T(1,128)}', space=vmem, size = 0x12000, scoped, tag = 'internal scratch']
  #allocation2 [shape = 'f32[8,128]{1,0:T(8,128)}', space=vmem, size = 0x1000, scoped, tag = 'scratch operand']
  %s0 = inlined_call_operand.vmem [shape: bf16[8,64], index: 0, kind: input, shape index: {}]
  %s1 = inlined_call_operand.hbm [shape: bf16[64,128], index: 1, kind: input, shape index: {}]
  %s2 = inlined_call_operand.vmem [shape: f32[1,128], index: 2, kind: input, shape index: {}]
  %s3 = inlined_call_operand.vmem [shape: f32[8,128], index: 3, kind: output, shape index: {}]
  %s4 = sld [smem:[#allocation0]]
  $region34: #{classifier_forward.1} parent=0
    _
  %s6 = ssub.s32 1, %s4
  %s7 = scalar_select 0, %s6, %s4
  $region1: #{classifier_forward.1} parent=0
    #allocation3 [shape = 'u8[16384]{0}', space=vmem, size = 0x4000, scoped, tag = 'input window, operand 1, single buffered']
    #allocation4 [shape = 's32[1]{0}', space=sflag, size = 0x4, scoped, tag = 'scoped memory for classifier_forward.1']
    %8 = vsyncpa [#allocation4], 0
    // Predicated region
    $region2: #{classifier_forward.1} parent=1 // pred_check
      _
    $region3: #{classifier_forward.1} parent=1 // pred_check_branch
      %10 = sbr.rel (0) target = $region5
    $region4: #{classifier_forward.1} parent=1 // pred_region
      _
    $region5: #{classifier_forward.1} parent=1 // pred_fallthru
      _
    // Predicated region
    $region6: #{classifier_forward.1} parent=1 // pred_check
      _
    $region7: #{classifier_forward.1} parent=1 // pred_check_branch
      %12 = sbr.rel (0) target = $region9
    $region8: #{classifier_forward.1} parent=1 // pred_region
      %s14 = ssub.s32 512, 512
      %15 = vsyncadd [#allocation4], %s14
      %s16 = sshll.u32 [#allocation3], 4
      %s17 = int_to_ptr.vmem [resolvable:$true] %s16
      %22 = dma.hbm_to_vmem [thread:$0]  %s1, 512, %s17, [#allocation4], 64, 64, 4
    $region9: #{classifier_forward.1} parent=1 // pred_fallthru
      _
    // Predicated region
    $region10: #{classifier_forward.1} parent=1 // pred_check
      _
    $region11: #{classifier_forward.1} parent=1 // pred_check_branch
      %24 = sbr.rel (0) target = $region13
    $region12: #{classifier_forward.1} parent=1 // pred_region
      _
    $region13: #{classifier_forward.1} parent=1 // pred_fallthru
      _
    // Predicated region
    $region14: #{classifier_forward.1} parent=1 // pred_check
      _
    $region15: #{classifier_forward.1} parent=1 // pred_check_branch
      %26 = sbr.rel (0) target = $region17
    $region16: #{classifier_forward.1} parent=1 // pred_region
      %27 = dma.done [#allocation4], 512
    $region17: #{classifier_forward.1} parent=1 // pred_fallthru
      _
    %p29 = scmp.eq.s32.totalorder 0, 0
    // Predicated region
    $region18: #{classifier_forward.1} parent=1 // pred_check
      %p30 = pneg %p29
    $region19: #{classifier_forward.1} parent=1 // pred_check_branch
      %32 = sbr.rel (%p30) target = $region21
    $region20: #{classifier_forward.1} parent=1 // pred_region
      %33 = vst [vmem:[#allocation2] sm:$0xff] 0.0
    $region21: #{classifier_forward.1} parent=1 // pred_fallthru
      _
    %v34 = vld [vmem:[#allocation2] sm:$0xff]
    %v35 = vld [vmem:[%s0] sm:$0xf]
    %v36 = vld [vmem:[#allocation3] sm:$0xf]
    %v37 = vld [vmem:[#allocation3 + $0x4] sm:$0xf]
    %v38 = vld [vmem:[#allocation3 + $0x8] sm:$0xf]
    %v39 = vld [vmem:[#allocation3 + $0xc] sm:$0xf]
    %v40 = vld [vmem:[#allocation3 + $0x10] sm:$0xf]
    %v41 = vld [vmem:[#allocation3 + $0x14] sm:$0xf]
    %v42 = vld [vmem:[#allocation3 + $0x18] sm:$0xf]
    %v43 = vld [vmem:[#allocation3 + $0x1c] sm:$0xf]
    %v52 = vunpack.c.l.b16 %v36
    %v53 = vunpack.c.l.b16 %v37
    %v54 = vunpack.c.l.b16 %v38
    %v55 = vunpack.c.l.b16 %v39
    %v56 = vunpack.c.l.b16 %v40
    %v57 = vunpack.c.l.b16 %v41
    %v58 = vunpack.c.l.b16 %v42
    %v59 = vunpack.c.l.b16 %v43
    %v60 = vpack.c.b16 %v53, %v52
    %v61 = vpack.c.b16 %v55, %v54
    %v62 = vpack.c.b16 %v57, %v56
    %v63 = vpack.c.b16 %v59, %v58
    %vm68 = vcmask 523264
    %v70 = vsel %vm68, %v35, 0
    %72 = vmatprep.subr.bf16.mxu0 0
    %73 = vmatpush1.bf16.msra.mxu0 0
    %74 = vmatprep.subr.bf16.mxu0 0
    %75 = vmatpush1.bf16.msra.mxu0 0
    %76 = vmatprep.subr.bf16.mxu0 0
    %77 = vmatpush1.bf16.msra.mxu0 0
    %78 = vmatprep.subr.bf16.mxu0 0
    %79 = vmatpush1.bf16.msra.mxu0 0
    %80 = vmatprep.subr.bf16.mxu0 0
    %81 = vmatpush1.bf16.msra.mxu0 %v63
    %82 = vmatprep.subr.bf16.mxu0 0
    %83 = vmatpush1.bf16.msra.mxu0 %v62
    %84 = vmatprep.subr.bf16.mxu0 0
    %85 = vmatpush1.bf16.msra.mxu0 %v61
    %86 = vmatprep.subr.bf16.mxu0 0
    %87 = vmatpush1.bf16.msra.mxu0 %v60
    %88 = vmatprep.subr.bf16.mxu0 0
    %89 = vmatpush2.bf16.msra.mxu0 0
    %90 = vmatprep.subr.bf16.mxu0 0
    %91 = vmatpush2.bf16.msra.mxu0 0
    %92 = vmatprep.subr.bf16.mxu0 0
    %93 = vmatpush2.bf16.msra.mxu0 0
    %94 = vmatprep.subr.bf16.mxu0 0
    %95 = vmatpush2.bf16.msra.mxu0 0
    %96 = vmatprep.subr.bf16.mxu0 0
    %97 = vmatpush2.bf16.msra.mxu0 0
    %98 = vmatprep.subr.bf16.mxu0 0
    %99 = vmatpush2.bf16.msra.mxu0 0
    %100 = vmatprep.subr.bf16.mxu0 0
    %101 = vmatpush2.bf16.msra.mxu0 0
    %102 = vmatprep.subr.bf16.mxu0 0
    %103 = vmatpush2.bf16.msra.mxu0 0
    %104 = vmatprep.mubr.bf16.mxu0 0
    %105 = vmatmul.mubr.bf16.gmra.mxu0 %v70
    %v106 = vpop.f32.mrf.mxu0
    %v107 = vadd.f32 0.0, %v106
    %v108 = vpop.f32.mrf.mxu0
    %v109 = vpop.f32.mrf.mxu0
    %v110 = vpop.f32.mrf.mxu0
    %111 = vdwg.mxu0
    %v112 = vadd.f32 %v34, %v107
    %113 = vst [vmem:[#allocation2] sm:$0xff] %v112
    // Predicated region
    $region22: #{classifier_forward.1} parent=1 // pred_check
      %p114 = pneg %p29
    $region23: #{classifier_forward.1} parent=1 // pred_check_branch
      %116 = sbr.rel (%p114) target = $region25
    $region24: #{classifier_forward.1} parent=1 // pred_region
      %v117 = vld [vmem:[#allocation2] sm:$0xff]
      %v118 = vld [vmem:[%s2] sm:$0x1]
      %v120 = vlaneseq
      %v121 = vshrl.u32 %v120, 7
      %v122 = vsub.s32 0, %v121
      %v123 = vrot.slane %v118, %v122
      %v125 = vadd.f32 %v117, %v123
      %126 = vst [vmem:[%s3] sm:$0xff] %v125
    $region25: #{classifier_forward.1} parent=1 // pred_fallthru
      _
    // Predicated region
    $region26: #{classifier_forward.1} parent=1 // pred_check
      _
    $region27: #{classifier_forward.1} parent=1 // pred_check_branch
      %128 = sbr.rel (0) target = $region29
    $region28: #{classifier_forward.1} parent=1 // pred_region
      _
    $region29: #{classifier_forward.1} parent=1 // pred_fallthru
      _
    // Predicated region
    $region30: #{classifier_forward.1} parent=1 // pred_check
      _
    $region31: #{classifier_forward.1} parent=1 // pred_check_branch
      %130 = sbr.rel (0) target = $region33
    $region32: #{classifier_forward.1} parent=1 // pred_region
      _
    $region33: #{classifier_forward.1} parent=1 // pred_fallthru
      _
    %131 = vsyncpa [#allocation4], 1

</llo_original>
